<compile_context>
chip_gen: v6e
topology: v6e:2x2x1
jax: 0.10.0
libtpu: 0.0.40
codegen_flags: <defaults>
</compile_context>

<pallas_src>
import jax
import jax.numpy as jnp
from jax.experimental import pallas as pl
from jax.experimental.pallas import tpu as pltpu

PAD = 128  # lane-aligned feature width for all padded layers


def mlp_kernel(x_ref, w_ref, b_ref, o_ref):
    """One (TM, 128) batch tile through all 5 layers, fully in VMEM.

    x_ref: (TM, 128) bf16   w_ref: (L, 128, 128) bf16   b_ref: (L, 1, 128) f32
    o_ref: (TM, 128) bf16
    """
    n_layers = w_ref.shape[0]
    h = x_ref[...]                                        # bf16 [TM, 128]
    for l in range(n_layers):                             # statically unrolled
        # bf16 operands -> native MXU path; f32 accumulation; bias/ReLU in f32.
        y = jnp.dot(h, w_ref[l], preferred_element_type=jnp.float32) + b_ref[l]
        if l < n_layers - 1:
            h = jnp.maximum(y, 0.0).astype(jnp.bfloat16)
        else:
            o_ref[...] = y.astype(o_ref.dtype)


def _round_up(n, m):
    return ((n + m - 1) // m) * m


def _pad_to(a, shape):
    """Zero-pad `a` up to `shape` (zero padding keeps padded lanes/rows inert
    through matmul + ReLU, so logical results are unchanged)."""
    pads = [(0, s - d) for d, s in zip(a.shape, shape)]
    return jnp.pad(a, pads)


def mlp_forward(x, params, *, block_m=1024):
    """x: [B, 42] f32.  params: list of (W [in, out] f32, b [1, out] f32)."""
    B, _ = x.shape
    d_out = params[-1][0].shape[1]
    n_layers = len(params)

    # Tile selection:
    #  * clamp the tile to round_up(B, 16) so tiny batches don't pad to 1024 rows
    #  * if a single tile would cover a larger batch, halve it so the 1-D
    #    "parallel" grid has >= 2 steps and both v7x TensorCores engage.
    bm = min(block_m, _round_up(B, 16))
    if _round_up(B, 16) > 16:
        bm = min(bm, _round_up(pl.cdiv(B, 2), 16))
    b_pad = _round_up(B, bm)
    grid = (b_pad // bm,)

    # bf16 activations in HBM: halves the activation DMA traffic of this
    # memory-bound kernel; padded lanes are exact zeros in bf16 too.
    x_p = _pad_to(x.astype(jnp.float32), (b_pad, PAD)).astype(jnp.bfloat16)

    # Stack the layers: one bf16 weight tensor + one f32 bias tensor, both
    # VMEM-resident across the whole grid via constant index_maps.
    w_stack = jnp.stack([_pad_to(w, (PAD, PAD)) for w, _ in params]).astype(jnp.bfloat16)
    b_stack = jnp.stack([_pad_to(b, (1, PAD)) for _, b in params]).astype(jnp.float32)

    in_specs = [
        pl.BlockSpec((bm, PAD), lambda i: (i, 0)),                    # x tile (pipelined)
        pl.BlockSpec((n_layers, PAD, PAD), lambda i: (0, 0, 0)),      # weights (resident)
        pl.BlockSpec((n_layers, 1, PAD), lambda i: (0, 0, 0)),        # biases  (resident)
    ]
    out_spec = pl.BlockSpec((bm, PAD), lambda i: (i, 0))

    flops = 2 * b_pad * PAD * PAD * n_layers
    bytes_accessed = (x_p.size * x_p.dtype.itemsize          # bf16 input
                      + b_pad * PAD * 2                       # bf16 output
                      + w_stack.size * 2 + b_stack.size * 4)  # resident params

    out_p = pl.pallas_call(
        mlp_kernel,
        out_shape=jax.ShapeDtypeStruct((b_pad, PAD), jnp.bfloat16),
        grid=grid,
        in_specs=in_specs,
        out_specs=out_spec,
        compiler_params=pltpu.CompilerParams(
            dimension_semantics=("parallel",),
            # Guardrail for v7x (64 MiB physical VMEM); actual usage here is
            # ~1-2 MiB (2x double-buffered bf16 tiles + ~165 KiB weights).
            vmem_limit_bytes=32 * 1024 * 1024),
        cost_estimate=pl.CostEstimate(
            flops=flops, transcendentals=0, bytes_accessed=bytes_accessed),
    )(x_p, w_stack, b_stack)

    return out_p[:B, :d_out].astype(jnp.float32)


def init_params(key):
    """Deterministic init mimicking PyTorch's default Linear init
    (uniform(-1/sqrt(fan_in), 1/sqrt(fan_in)))."""
    dims = [(42, 100), (100, 100), (100, 100), (100, 100), (100, 3)]
    params = []
    for (d_in, d_out) in dims:
        key, kw, kb = jax.random.split(key, 3)
        bound = 1.0 / jnp.sqrt(jnp.float32(d_in))
        w = jax.random.uniform(kw, (d_in, d_out), jnp.float32, -bound, bound)
        b = jax.random.uniform(kb, (1, d_out), jnp.float32, -bound, bound)
        params.append((w, b))
    return params


def mlp_reference(x, params):
    """Reference mirroring the kernel's numerics (bf16 matmul operands and
    bf16 activation/output storage, f32 accumulation)."""
    h = x.astype(jnp.bfloat16)
    n = len(params)
    y = None
    for i, (w, b) in enumerate(params):
        y = jnp.dot(h, w.astype(jnp.bfloat16),
                    preferred_element_type=jnp.float32) + b
        if i < n - 1:
            h = jnp.maximum(y, 0.0).astype(jnp.bfloat16)
    return y.astype(jnp.bfloat16).astype(jnp.float32)


if __name__ == "__main__":
    key = jax.random.PRNGKey(0)
    key, kx = jax.random.split(key)
    B = 8
    x = jax.random.normal(kx, (B, 42), jnp.float32)
    params = init_params(key)

    out = mlp_forward(x, params)
    out = jax.block_until_ready(out)

    ref = mlp_reference(x, params)
    assert out.shape == (B, 3), out.shape
    assert jnp.allclose(out, ref, atol=2e-2, rtol=2e-2), "mismatch vs reference"
    print("KERNEL_OK")
</pallas_src>

<mosaic_0001>
module attributes {stable_mosaic.version = 11 : i64} {
  func.func @mlp_kernel(%arg0: i32, %arg1: memref<16x128xbf16, #tpu.memory_space<vmem>>, %arg2: memref<5x128x128xbf16, #tpu.memory_space<vmem>>, %arg3: memref<5x1x128xf32, #tpu.memory_space<vmem>>, %arg4: memref<16x128xbf16, #tpu.memory_space<vmem>>) attributes {dimension_semantics = [#tpu.dimension_semantics<parallel>], iteration_bounds = array<i64: 1>, scalar_prefetch = 0 : i64, scratch_operands = 0 : i64, tpu.core_type = #tpu.core_type<tc>, window_params = [{transform_indices = @transform_0, window_bounds = array<i64: 16, 128>}, {pipeline_mode = #tpu.pipeline_mode<synchronous>, transform_indices = @transform_1, window_bounds = array<i64: 5, 128, 128>}, {pipeline_mode = #tpu.pipeline_mode<synchronous>, transform_indices = @transform_2, window_bounds = array<i64: 5, 1, 128>}, {transform_indices = @transform_3, window_bounds = array<i64: 16, 128>}]} {
    %c0 = arith.constant 0 : index
    %c0_0 = arith.constant 0 : index
    %0 = vector.load %arg1[%c0, %c0_0] : memref<16x128xbf16, #tpu.memory_space<vmem>>, vector<16x128xbf16>
    %c0_1 = arith.constant 0 : index
    %c0_2 = arith.constant 0 : index
    %c0_3 = arith.constant 0 : index
    %1 = vector.load %arg2[%c0_1, %c0_2, %c0_3] : memref<5x128x128xbf16, #tpu.memory_space<vmem>>, vector<1x128x128xbf16>
    %2 = vector.shape_cast %1 : vector<1x128x128xbf16> to vector<128x128xbf16>
    %cst = arith.constant dense<0.000000e+00> : vector<16x128xf32>
    %3 = tpu.matmul %0, %2, %cst {dimension_numbers = #tpu.dot_dimension_numbers<[1], [0], [0], [1], [0, 0, 1, 1], [], []>} : vector<16x128xbf16>, vector<128x128xbf16>, vector<16x128xf32> -> vector<16x128xf32>
    %c0_4 = arith.constant 0 : index
    %c0_5 = arith.constant 0 : index
    %c0_6 = arith.constant 0 : index
    %4 = vector.load %arg3[%c0_4, %c0_5, %c0_6] : memref<5x1x128xf32, #tpu.memory_space<vmem>>, vector<1x1x128xf32>
    %5 = vector.shape_cast %4 : vector<1x1x128xf32> to vector<1x128xf32>
    %6 = vector.broadcast %5 : vector<1x128xf32> to vector<16x128xf32>
    %7 = arith.addf %3, %6 : vector<16x128xf32>
    %cst_7 = arith.constant 0.000000e+00 : f32
    %8 = vector.broadcast %cst_7 : f32 to vector<16x128xf32>
    %9 = arith.maximumf %7, %8 : vector<16x128xf32>
    %10 = arith.truncf %9 : vector<16x128xf32> to vector<16x128xbf16>
    %c1 = arith.constant 1 : index
    %c0_8 = arith.constant 0 : index
    %c0_9 = arith.constant 0 : index
    %11 = vector.load %arg2[%c1, %c0_8, %c0_9] : memref<5x128x128xbf16, #tpu.memory_space<vmem>>, vector<1x128x128xbf16>
    %12 = vector.shape_cast %11 : vector<1x128x128xbf16> to vector<128x128xbf16>
    %cst_10 = arith.constant dense<0.000000e+00> : vector<16x128xf32>
    %13 = tpu.matmul %10, %12, %cst_10 {dimension_numbers = #tpu.dot_dimension_numbers<[1], [0], [0], [1], [0, 0, 1, 1], [], []>} : vector<16x128xbf16>, vector<128x128xbf16>, vector<16x128xf32> -> vector<16x128xf32>
    %c1_11 = arith.constant 1 : index
    %c0_12 = arith.constant 0 : index
    %c0_13 = arith.constant 0 : index
    %14 = vector.load %arg3[%c1_11, %c0_12, %c0_13] : memref<5x1x128xf32, #tpu.memory_space<vmem>>, vector<1x1x128xf32>
    %15 = vector.shape_cast %14 : vector<1x1x128xf32> to vector<1x128xf32>
    %16 = vector.broadcast %15 : vector<1x128xf32> to vector<16x128xf32>
    %17 = arith.addf %13, %16 : vector<16x128xf32>
    %cst_14 = arith.constant 0.000000e+00 : f32
    %18 = vector.broadcast %cst_14 : f32 to vector<16x128xf32>
    %19 = arith.maximumf %17, %18 : vector<16x128xf32>
    %20 = arith.truncf %19 : vector<16x128xf32> to vector<16x128xbf16>
    %c2 = arith.constant 2 : index
    %c0_15 = arith.constant 0 : index
    %c0_16 = arith.constant 0 : index
    %21 = vector.load %arg2[%c2, %c0_15, %c0_16] : memref<5x128x128xbf16, #tpu.memory_space<vmem>>, vector<1x128x128xbf16>
    %22 = vector.shape_cast %21 : vector<1x128x128xbf16> to vector<128x128xbf16>
    %cst_17 = arith.constant dense<0.000000e+00> : vector<16x128xf32>
    %23 = tpu.matmul %20, %22, %cst_17 {dimension_numbers = #tpu.dot_dimension_numbers<[1], [0], [0], [1], [0, 0, 1, 1], [], []>} : vector<16x128xbf16>, vector<128x128xbf16>, vector<16x128xf32> -> vector<16x128xf32>
    %c2_18 = arith.constant 2 : index
    %c0_19 = arith.constant 0 : index
    %c0_20 = arith.constant 0 : index
    %24 = vector.load %arg3[%c2_18, %c0_19, %c0_20] : memref<5x1x128xf32, #tpu.memory_space<vmem>>, vector<1x1x128xf32>
    %25 = vector.shape_cast %24 : vector<1x1x128xf32> to vector<1x128xf32>
    %26 = vector.broadcast %25 : vector<1x128xf32> to vector<16x128xf32>
    %27 = arith.addf %23, %26 : vector<16x128xf32>
    %cst_21 = arith.constant 0.000000e+00 : f32
    %28 = vector.broadcast %cst_21 : f32 to vector<16x128xf32>
    %29 = arith.maximumf %27, %28 : vector<16x128xf32>
    %30 = arith.truncf %29 : vector<16x128xf32> to vector<16x128xbf16>
    %c3 = arith.constant 3 : index
    %c0_22 = arith.constant 0 : index
    %c0_23 = arith.constant 0 : index
    %31 = vector.load %arg2[%c3, %c0_22, %c0_23] : memref<5x128x128xbf16, #tpu.memory_space<vmem>>, vector<1x128x128xbf16>
    %32 = vector.shape_cast %31 : vector<1x128x128xbf16> to vector<128x128xbf16>
    %cst_24 = arith.constant dense<0.000000e+00> : vector<16x128xf32>
    %33 = tpu.matmul %30, %32, %cst_24 {dimension_numbers = #tpu.dot_dimension_numbers<[1], [0], [0], [1], [0, 0, 1, 1], [], []>} : vector<16x128xbf16>, vector<128x128xbf16>, vector<16x128xf32> -> vector<16x128xf32>
    %c3_25 = arith.constant 3 : index
    %c0_26 = arith.constant 0 : index
    %c0_27 = arith.constant 0 : index
    %34 = vector.load %arg3[%c3_25, %c0_26, %c0_27] : memref<5x1x128xf32, #tpu.memory_space<vmem>>, vector<1x1x128xf32>
    %35 = vector.shape_cast %34 : vector<1x1x128xf32> to vector<1x128xf32>
    %36 = vector.broadcast %35 : vector<1x128xf32> to vector<16x128xf32>
    %37 = arith.addf %33, %36 : vector<16x128xf32>
    %cst_28 = arith.constant 0.000000e+00 : f32
    %38 = vector.broadcast %cst_28 : f32 to vector<16x128xf32>
    %39 = arith.maximumf %37, %38 : vector<16x128xf32>
    %40 = arith.truncf %39 : vector<16x128xf32> to vector<16x128xbf16>
    %c4 = arith.constant 4 : index
    %c0_29 = arith.constant 0 : index
    %c0_30 = arith.constant 0 : index
    %41 = vector.load %arg2[%c4, %c0_29, %c0_30] : memref<5x128x128xbf16, #tpu.memory_space<vmem>>, vector<1x128x128xbf16>
    %42 = vector.shape_cast %41 : vector<1x128x128xbf16> to vector<128x128xbf16>
    %cst_31 = arith.constant dense<0.000000e+00> : vector<16x128xf32>
    %43 = tpu.matmul %40, %42, %cst_31 {dimension_numbers = #tpu.dot_dimension_numbers<[1], [0], [0], [1], [0, 0, 1, 1], [], []>} : vector<16x128xbf16>, vector<128x128xbf16>, vector<16x128xf32> -> vector<16x128xf32>
    %c4_32 = arith.constant 4 : index
    %c0_33 = arith.constant 0 : index
    %c0_34 = arith.constant 0 : index
    %44 = vector.load %arg3[%c4_32, %c0_33, %c0_34] : memref<5x1x128xf32, #tpu.memory_space<vmem>>, vector<1x1x128xf32>
    %45 = vector.shape_cast %44 : vector<1x1x128xf32> to vector<1x128xf32>
    %46 = vector.broadcast %45 : vector<1x128xf32> to vector<16x128xf32>
    %47 = arith.addf %43, %46 : vector<16x128xf32>
    %48 = arith.truncf %47 : vector<16x128xf32> to vector<16x128xbf16>
    %c0_35 = arith.constant 0 : index
    %c0_36 = arith.constant 0 : index
    %49 = vector.load %arg4[%c0_35, %c0_36] : memref<16x128xbf16, #tpu.memory_space<vmem>>, vector<16x128xbf16>
    tpu.vector_store %arg4[%c0_35, %c0_36], %48 {strides = array<i32>} : memref<16x128xbf16, #tpu.memory_space<vmem>>, vector<16x128xbf16>,
    return
  }
  func.func @transform_0(%arg0: i32) -> (i32, i32) {
    %c0_i32 = arith.constant 0 : i32
    %c0_i32_0 = arith.constant 0 : i32
    return %arg0, %c0_i32 : i32, i32
  }
  func.func @transform_1(%arg0: i32) -> (i32, i32, i32) {
    %c0_i32 = arith.constant 0 : i32
    %c0_i32_0 = arith.constant 0 : i32
    %c0_i32_1 = arith.constant 0 : i32
    %c0_i32_2 = arith.constant 0 : i32
    return %c0_i32, %c0_i32_0, %c0_i32_1 : i32, i32, i32
  }
  func.func @transform_2(%arg0: i32) -> (i32, i32, i32) {
    %c0_i32 = arith.constant 0 : i32
    %c0_i32_0 = arith.constant 0 : i32
    %c0_i32_1 = arith.constant 0 : i32
    %c0_i32_2 = arith.constant 0 : i32
    return %c0_i32, %c0_i32_0, %c0_i32_1 : i32, i32, i32
  }
  func.func @transform_3(%arg0: i32) -> (i32, i32) {
    %c0_i32 = arith.constant 0 : i32
    %c0_i32_0 = arith.constant 0 : i32
    return %arg0, %c0_i32 : i32, i32
  }
}

</mosaic_0001>

<llo_original>
// kernel: tpu_custom_call.1
$region0: #{tpu_custom_call.1}
  #allocation0 [shape = 'u32[]', space=smem, size = 0x4, offset = 0x4, fixed_abs, tag = 'smem constant byte address 0x4 - core index']
  #allocation1 [shape = 'u32[144,128]{1,0:T(1,128)}', space=vmem, size = 0x12000, scoped, tag = 'internal scratch']
  %s0 = inlined_call_operand.hbm [shape: bf16[16,128], index: 0, kind: input, shape index: {}]
  %s1 = inlined_call_operand.hbm [shape: bf16[5,128,128], index: 1, kind: input, shape index: {}]
  %s2 = inlined_call_operand.hbm [shape: f32[5,1,128], index: 2, kind: input, shape index: {}]
  %s3 = inlined_call_operand.hbm [shape: bf16[16,128], index: 3, kind: output, shape index: {}]
  %s4 = sld [smem:[#allocation0]]
  $region34: #{tpu_custom_call.1} parent=0
    _
  %s6 = ssub.s32 1, %s4
  %s7 = scalar_select 0, %s6, %s4
  $region1: #{tpu_custom_call.1} parent=0
    #allocation2 [shape = 'u8[4096]{0}', space=vmem, size = 0x1000, scoped, tag = 'input window, operand 0, single buffered']
    #allocation3 [shape = 's32[1]{0}', space=sflag, size = 0x4, scoped, tag = 'scoped memory for tpu_custom_call.1']
    #allocation4 [shape = 's32[1]{0}', space=sflag, size = 0x4, scoped, tag = 'scoped memory for tpu_custom_call.1']
    #allocation5 [shape = 'u8[163840]{0}', space=vmem, size = 0x28000, scoped, tag = 'input window, operand 1, single buffered']
    #allocation6 [shape = 's32[1]{0}', space=sflag, size = 0x4, scoped, tag = 'scoped memory for tpu_custom_call.1']
    #allocation7 [shape = 'u8[2560]{0}', space=vmem, size = 0xc00, scoped, tag = 'input window, operand 2, single buffered']
    #allocation8 [shape = 'u8[4096]{0}', space=vmem, size = 0x1000, scoped, tag = 'output window, operand 0, single buffered']
    %8 = vsyncpa [#allocation3], 0
    %9 = vsyncpa [#allocation6], 0
    %10 = vsyncpa [#allocation4], 0
    // Predicated region
    $region2: #{tpu_custom_call.1} parent=1 // pred_check
      _
    $region3: #{tpu_custom_call.1} parent=1 // pred_check_branch
      %12 = sbr.rel (0) target = $region5
    $region4: #{tpu_custom_call.1} parent=1 // pred_region
      %s14 = ssub.s32 128, 128
      %15 = vsyncadd [#allocation3], %s14
      %s16 = sshll.u32 [#allocation2], 4
      %s17 = int_to_ptr.vmem [resolvable:$true] %s16
      %22 = dma.hbm_to_vmem [thread:$0]  %s0, 128, %s17, [#allocation3], 64, 64, 4
    $region5: #{tpu_custom_call.1} parent=1 // pred_fallthru
      _
    // Predicated region
    $region6: #{tpu_custom_call.1} parent=1 // pred_check
      _
    $region7: #{tpu_custom_call.1} parent=1 // pred_check_branch
      %24 = sbr.rel (0) target = $region9
    $region8: #{tpu_custom_call.1} parent=1 // pred_region
      %s26 = ssub.s32 5120, 5120
      %27 = vsyncadd [#allocation6], %s26
      %s28 = sshll.u32 [#allocation5], 4
      %s29 = int_to_ptr.vmem [resolvable:$true] %s28
      %34 = dma.hbm_to_vmem [thread:$0]  %s1, 5120, %s29, [#allocation6], 64, 64, 4
    $region9: #{tpu_custom_call.1} parent=1 // pred_fallthru
      _
    // Predicated region
    $region10: #{tpu_custom_call.1} parent=1 // pred_check
      _
    $region11: #{tpu_custom_call.1} parent=1 // pred_check_branch
      %36 = sbr.rel (0) target = $region13
    $region12: #{tpu_custom_call.1} parent=1 // pred_region
      %s38 = ssub.s32 80, 80
      %39 = vsyncadd [#allocation6], %s38
      %s40 = sshll.u32 [#allocation7], 4
      %s41 = int_to_ptr.vmem [resolvable:$true] %s40
      %46 = dma.hbm_to_vmem [thread:$0]  %s2, 80, %s41, [#allocation6], 16, 16, 1
    $region13: #{tpu_custom_call.1} parent=1 // pred_fallthru
      _
    // Predicated region
    $region14: #{tpu_custom_call.1} parent=1 // pred_check
      _
    $region15: #{tpu_custom_call.1} parent=1 // pred_check_branch
      %48 = sbr.rel (0) target = $region17
    $region16: #{tpu_custom_call.1} parent=1 // pred_region
      %49 = dma.done [#allocation3], 128
    $region17: #{tpu_custom_call.1} parent=1 // pred_fallthru
      _
    // Predicated region
    $region18: #{tpu_custom_call.1} parent=1 // pred_check
      _
    $region19: #{tpu_custom_call.1} parent=1 // pred_check_branch
      %51 = sbr.rel (0) target = $region21
    $region20: #{tpu_custom_call.1} parent=1 // pred_region
      %52 = dma.done [#allocation6], 5120
    $region21: #{tpu_custom_call.1} parent=1 // pred_fallthru
      _
    // Predicated region
    $region22: #{tpu_custom_call.1} parent=1 // pred_check
      _
    $region23: #{tpu_custom_call.1} parent=1 // pred_check_branch
      %54 = sbr.rel (0) target = $region25
    $region24: #{tpu_custom_call.1} parent=1 // pred_region
      %55 = dma.done [#allocation6], 80
    $region25: #{tpu_custom_call.1} parent=1 // pred_fallthru
      _
    %v57 = vld [vmem:[#allocation2] sm:$0xf]
    %v58 = vld [vmem:[#allocation2 + $0x4] sm:$0xf]
    %v59 = vld [vmem:[#allocation5] sm:$0xf]
    %v60 = vld [vmem:[#allocation5 + $0x4] sm:$0xf]
    %v61 = vld [vmem:[#allocation5 + $0x8] sm:$0xf]
    %v62 = vld [vmem:[#allocation5 + $0xc] sm:$0xf]
    %v63 = vld [vmem:[#allocation5 + $0x10] sm:$0xf]
    %v64 = vld [vmem:[#allocation5 + $0x14] sm:$0xf]
    %v65 = vld [vmem:[#allocation5 + $0x18] sm:$0xf]
    %v66 = vld [vmem:[#allocation5 + $0x1c] sm:$0xf]
    %v67 = vld [vmem:[#allocation5 + $0x20] sm:$0xf]
    %v68 = vld [vmem:[#allocation5 + $0x24] sm:$0xf]
    %v69 = vld [vmem:[#allocation5 + $0x28] sm:$0xf]
    %v70 = vld [vmem:[#allocation5 + $0x2c] sm:$0xf]
    %v71 = vld [vmem:[#allocation5 + $0x30] sm:$0xf]
    %v72 = vld [vmem:[#allocation5 + $0x34] sm:$0xf]
    %v73 = vld [vmem:[#allocation5 + $0x38] sm:$0xf]
    %v74 = vld [vmem:[#allocation5 + $0x3c] sm:$0xf]
    %v75 = vld [vmem:[#allocation7] sm:$0x1]
    %v77 = vlaneseq
    %v78 = vshrl.u32 %v77, 7
    %v79 = vsub.s32 0, %v78
    %v80 = vrot.slane %v75, %v79
    %v84 = vunpack.c.l.b16 %v57
    %v85 = vunpack.c.l.b16 %v58
    %v86 = vpack.c.b16 %v85, %v84
    %v104 = vunpack.c.l.b16 %v59
    %v105 = vunpack.c.l.b16 %v60
    %v106 = vunpack.c.l.b16 %v61
    %v107 = vunpack.c.l.b16 %v62
    %v108 = vunpack.c.l.b16 %v63
    %v109 = vunpack.c.l.b16 %v64
    %v110 = vunpack.c.l.b16 %v65
    %v111 = vunpack.c.l.b16 %v66
    %v112 = vunpack.c.l.b16 %v67
    %v113 = vunpack.c.l.b16 %v68
    %v114 = vunpack.c.l.b16 %v69
    %v115 = vunpack.c.l.b16 %v70
    %v116 = vunpack.c.l.b16 %v71
    %v117 = vunpack.c.l.b16 %v72
    %v118 = vunpack.c.l.b16 %v73
    %v119 = vunpack.c.l.b16 %v74
    %v120 = vpack.c.b16 %v105, %v104
    %v121 = vpack.c.b16 %v107, %v106
    %v122 = vpack.c.b16 %v109, %v108
    %v123 = vpack.c.b16 %v111, %v110
    %v124 = vpack.c.b16 %v113, %v112
    %v125 = vpack.c.b16 %v115, %v114
    %v126 = vpack.c.b16 %v117, %v116
    %v127 = vpack.c.b16 %v119, %v118
    %136 = vmatprep.subr.bf16.mxu0 0
    %137 = vmatpush1.bf16.msra.mxu0 %v127
    %138 = vmatprep.subr.bf16.mxu0 0
    %139 = vmatpush1.bf16.msra.mxu0 %v126
    %140 = vmatprep.subr.bf16.mxu0 0
    %141 = vmatpush1.bf16.msra.mxu0 %v125
    %142 = vmatprep.subr.bf16.mxu0 0
    %143 = vmatpush1.bf16.msra.mxu0 %v124
    %144 = vmatprep.subr.bf16.mxu0 0
    %145 = vmatpush1.bf16.msra.mxu0 %v123
    %146 = vmatprep.subr.bf16.mxu0 0
    %147 = vmatpush1.bf16.msra.mxu0 %v122
    %148 = vmatprep.subr.bf16.mxu0 0
    %149 = vmatpush1.bf16.msra.mxu0 %v121
    %150 = vmatprep.subr.bf16.mxu0 0
    %151 = vmatpush1.bf16.msra.mxu0 %v120
    %152 = vmatprep.subr.bf16.mxu0 0
    %153 = vmatpush2.bf16.msra.mxu0 0
    %154 = vmatprep.subr.bf16.mxu0 0
    %155 = vmatpush2.bf16.msra.mxu0 0
    %156 = vmatprep.subr.bf16.mxu0 0
    %157 = vmatpush2.bf16.msra.mxu0 0
    %158 = vmatprep.subr.bf16.mxu0 0
    %159 = vmatpush2.bf16.msra.mxu0 0
    %160 = vmatprep.subr.bf16.mxu0 0
    %161 = vmatpush2.bf16.msra.mxu0 0
    %162 = vmatprep.subr.bf16.mxu0 0
    %163 = vmatpush2.bf16.msra.mxu0 0
    %164 = vmatprep.subr.bf16.mxu0 0
    %165 = vmatpush2.bf16.msra.mxu0 0
    %166 = vmatprep.subr.bf16.mxu0 0
    %167 = vmatpush2.bf16.msra.mxu0 0
    %168 = vmatprep.mubr.bf16.mxu0 0
    %169 = vmatmul.mubr.bf16.gmra.mxu0 %v86
    %v170 = vpop.f32.mrf.mxu0
    %v171 = vadd.f32 %v80, %v170
    %v172 = vpop.f32.mrf.mxu0
    %v173 = vpop.f32.mrf.mxu0
    %v174 = vadd.f32 %v80, %v173
    %v175 = vpop.f32.mrf.mxu0
    %176 = vdwg.mxu0
    %v177 = vmax.f32 %v171, 0.0
    %v178 = vmax.f32 %v174, 0.0
    %v179 = vpack.c.bf16 %v178, %v177
    %s180 = scalar_lea.vmem [#allocation5], 64
    %v181 = vld [vmem:[%s180] sm:$0xf]
    %v182 = vld [vmem:[%s180 + $0x4] sm:$0xf]
    %v183 = vld [vmem:[%s180 + $0x8] sm:$0xf]
    %v184 = vld [vmem:[%s180 + $0xc] sm:$0xf]
    %v185 = vld [vmem:[%s180 + $0x10] sm:$0xf]
    %v186 = vld [vmem:[%s180 + $0x14] sm:$0xf]
    %v187 = vld [vmem:[%s180 + $0x18] sm:$0xf]
    %v188 = vld [vmem:[%s180 + $0x1c] sm:$0xf]
    %v189 = vld [vmem:[%s180 + $0x20] sm:$0xf]
    %v190 = vld [vmem:[%s180 + $0x24] sm:$0xf]
    %v191 = vld [vmem:[%s180 + $0x28] sm:$0xf]
    %v192 = vld [vmem:[%s180 + $0x2c] sm:$0xf]
    %v193 = vld [vmem:[%s180 + $0x30] sm:$0xf]
    %v194 = vld [vmem:[%s180 + $0x34] sm:$0xf]
    %v195 = vld [vmem:[%s180 + $0x38] sm:$0xf]
    %v196 = vld [vmem:[%s180 + $0x3c] sm:$0xf]
    %s197 = scalar_lea.vmem [#allocation7], 1
    %v198 = vld [vmem:[%s197] sm:$0x1]
    %v200 = vlaneseq
    %v201 = vshrl.u32 %v200, 7
    %v202 = vsub.s32 0, %v201
    %v203 = vrot.slane %v198, %v202
    %v221 = vunpack.c.l.b16 %v181
    %v222 = vunpack.c.l.b16 %v182
    %v223 = vunpack.c.l.b16 %v183
    %v224 = vunpack.c.l.b16 %v184
    %v225 = vunpack.c.l.b16 %v185
    %v226 = vunpack.c.l.b16 %v186
    %v227 = vunpack.c.l.b16 %v187
    %v228 = vunpack.c.l.b16 %v188
    %v229 = vunpack.c.l.b16 %v189
    %v230 = vunpack.c.l.b16 %v190
    %v231 = vunpack.c.l.b16 %v191
    %v232 = vunpack.c.l.b16 %v192
    %v233 = vunpack.c.l.b16 %v193
    %v234 = vunpack.c.l.b16 %v194
    %v235 = vunpack.c.l.b16 %v195
    %v236 = vunpack.c.l.b16 %v196
    %v237 = vpack.c.b16 %v222, %v221
    %v238 = vpack.c.b16 %v224, %v223
    %v239 = vpack.c.b16 %v226, %v225
    %v240 = vpack.c.b16 %v228, %v227
    %v241 = vpack.c.b16 %v230, %v229
    %v242 = vpack.c.b16 %v232, %v231
    %v243 = vpack.c.b16 %v234, %v233
    %v244 = vpack.c.b16 %v236, %v235
    %253 = vmatprep.subr.bf16.mxu0 0
    %254 = vmatpush1.bf16.msra.mxu0 %v244
    %255 = vmatprep.subr.bf16.mxu0 0
    %256 = vmatpush1.bf16.msra.mxu0 %v243
    %257 = vmatprep.subr.bf16.mxu0 0
    %258 = vmatpush1.bf16.msra.mxu0 %v242
    %259 = vmatprep.subr.bf16.mxu0 0
    %260 = vmatpush1.bf16.msra.mxu0 %v241
    %261 = vmatprep.subr.bf16.mxu0 0
    %262 = vmatpush1.bf16.msra.mxu0 %v240
    %263 = vmatprep.subr.bf16.mxu0 0
    %264 = vmatpush1.bf16.msra.mxu0 %v239
    %265 = vmatprep.subr.bf16.mxu0 0
    %266 = vmatpush1.bf16.msra.mxu0 %v238
    %267 = vmatprep.subr.bf16.mxu0 0
    %268 = vmatpush1.bf16.msra.mxu0 %v237
    %269 = vmatprep.subr.bf16.mxu0 0
    %270 = vmatpush2.bf16.msra.mxu0 0
    %271 = vmatprep.subr.bf16.mxu0 0
    %272 = vmatpush2.bf16.msra.mxu0 0
    %273 = vmatprep.subr.bf16.mxu0 0
    %274 = vmatpush2.bf16.msra.mxu0 0
    %275 = vmatprep.subr.bf16.mxu0 0
    %276 = vmatpush2.bf16.msra.mxu0 0
    %277 = vmatprep.subr.bf16.mxu0 0
    %278 = vmatpush2.bf16.msra.mxu0 0
    %279 = vmatprep.subr.bf16.mxu0 0
    %280 = vmatpush2.bf16.msra.mxu0 0
    %281 = vmatprep.subr.bf16.mxu0 0
    %282 = vmatpush2.bf16.msra.mxu0 0
    %283 = vmatprep.subr.bf16.mxu0 0
    %284 = vmatpush2.bf16.msra.mxu0 0
    %285 = vmatprep.mubr.bf16.mxu0 0
    %286 = vmatmul.mubr.bf16.gmra.mxu0 %v179
    %v287 = vpop.f32.mrf.mxu0
    %v288 = vadd.f32 %v203, %v287
    %v289 = vpop.f32.mrf.mxu0
    %v290 = vpop.f32.mrf.mxu0
    %v291 = vadd.f32 %v203, %v290
    %v292 = vpop.f32.mrf.mxu0
    %293 = vdwg.mxu0
    %v294 = vmax.f32 %v288, 0.0
    %v295 = vmax.f32 %v291, 0.0
    %v296 = vpack.c.bf16 %v295, %v294
    %s297 = scalar_lea.vmem [#allocation5], 128
    %v298 = vld [vmem:[%s297] sm:$0xf]
    %v299 = vld [vmem:[%s297 + $0x4] sm:$0xf]
    %v300 = vld [vmem:[%s297 + $0x8] sm:$0xf]
    %v301 = vld [vmem:[%s297 + $0xc] sm:$0xf]
    %v302 = vld [vmem:[%s297 + $0x10] sm:$0xf]
    %v303 = vld [vmem:[%s297 + $0x14] sm:$0xf]
    %v304 = vld [vmem:[%s297 + $0x18] sm:$0xf]
    %v305 = vld [vmem:[%s297 + $0x1c] sm:$0xf]
    %v306 = vld [vmem:[%s297 + $0x20] sm:$0xf]
    %v307 = vld [vmem:[%s297 + $0x24] sm:$0xf]
    %v308 = vld [vmem:[%s297 + $0x28] sm:$0xf]
    %v309 = vld [vmem:[%s297 + $0x2c] sm:$0xf]
    %v310 = vld [vmem:[%s297 + $0x30] sm:$0xf]
    %v311 = vld [vmem:[%s297 + $0x34] sm:$0xf]
    %v312 = vld [vmem:[%s297 + $0x38] sm:$0xf]
    %v313 = vld [vmem:[%s297 + $0x3c] sm:$0xf]
    %s314 = scalar_lea.vmem [#allocation7], 2
    %v315 = vld [vmem:[%s314] sm:$0x1]
    %v317 = vlaneseq
    %v318 = vshrl.u32 %v317, 7
    %v319 = vsub.s32 0, %v318
    %v320 = vrot.slane %v315, %v319
    %v338 = vunpack.c.l.b16 %v298
    %v339 = vunpack.c.l.b16 %v299
    %v340 = vunpack.c.l.b16 %v300
    %v341 = vunpack.c.l.b16 %v301
    %v342 = vunpack.c.l.b16 %v302
    %v343 = vunpack.c.l.b16 %v303
    %v344 = vunpack.c.l.b16 %v304
    %v345 = vunpack.c.l.b16 %v305
    %v346 = vunpack.c.l.b16 %v306
    %v347 = vunpack.c.l.b16 %v307
    %v348 = vunpack.c.l.b16 %v308
    %v349 = vunpack.c.l.b16 %v309
    %v350 = vunpack.c.l.b16 %v310
    %v351 = vunpack.c.l.b16 %v311
    %v352 = vunpack.c.l.b16 %v312
    %v353 = vunpack.c.l.b16 %v313
    %v354 = vpack.c.b16 %v339, %v338
    %v355 = vpack.c.b16 %v341, %v340
    %v356 = vpack.c.b16 %v343, %v342
    %v357 = vpack.c.b16 %v345, %v344
    %v358 = vpack.c.b16 %v347, %v346
    %v359 = vpack.c.b16 %v349, %v348
    %v360 = vpack.c.b16 %v351, %v350
    %v361 = vpack.c.b16 %v353, %v352
    %370 = vmatprep.subr.bf16.mxu0 0
    %371 = vmatpush1.bf16.msra.mxu0 %v361
    %372 = vmatprep.subr.bf16.mxu0 0
    %373 = vmatpush1.bf16.msra.mxu0 %v360
    %374 = vmatprep.subr.bf16.mxu0 0
    %375 = vmatpush1.bf16.msra.mxu0 %v359
    %376 = vmatprep.subr.bf16.mxu0 0
    %377 = vmatpush1.bf16.msra.mxu0 %v358
    %378 = vmatprep.subr.bf16.mxu0 0
    %379 = vmatpush1.bf16.msra.mxu0 %v357
    %380 = vmatprep.subr.bf16.mxu0 0
    %381 = vmatpush1.bf16.msra.mxu0 %v356
    %382 = vmatprep.subr.bf16.mxu0 0
    %383 = vmatpush1.bf16.msra.mxu0 %v355
    %384 = vmatprep.subr.bf16.mxu0 0
    %385 = vmatpush1.bf16.msra.mxu0 %v354
    %386 = vmatprep.subr.bf16.mxu0 0
    %387 = vmatpush2.bf16.msra.mxu0 0
    %388 = vmatprep.subr.bf16.mxu0 0
    %389 = vmatpush2.bf16.msra.mxu0 0
    %390 = vmatprep.subr.bf16.mxu0 0
    %391 = vmatpush2.bf16.msra.mxu0 0
    %392 = vmatprep.subr.bf16.mxu0 0
    %393 = vmatpush2.bf16.msra.mxu0 0
    %394 = vmatprep.subr.bf16.mxu0 0
    %395 = vmatpush2.bf16.msra.mxu0 0
    %396 = vmatprep.subr.bf16.mxu0 0
    %397 = vmatpush2.bf16.msra.mxu0 0
    %398 = vmatprep.subr.bf16.mxu0 0
    %399 = vmatpush2.bf16.msra.mxu0 0
    %400 = vmatprep.subr.bf16.mxu0 0
    %401 = vmatpush2.bf16.msra.mxu0 0
    %402 = vmatprep.mubr.bf16.mxu0 0
    %403 = vmatmul.mubr.bf16.gmra.mxu0 %v296
    %v404 = vpop.f32.mrf.mxu0
    %v405 = vadd.f32 %v320, %v404
    %v406 = vpop.f32.mrf.mxu0
    %v407 = vpop.f32.mrf.mxu0
    %v408 = vadd.f32 %v320, %v407
    %v409 = vpop.f32.mrf.mxu0
    %410 = vdwg.mxu0
    %v411 = vmax.f32 %v405, 0.0
    %v412 = vmax.f32 %v408, 0.0
    %v413 = vpack.c.bf16 %v412, %v411
    %s414 = scalar_lea.vmem [#allocation5], 192
    %v415 = vld [vmem:[%s414] sm:$0xf]
    %v416 = vld [vmem:[%s414 + $0x4] sm:$0xf]
    %v417 = vld [vmem:[%s414 + $0x8] sm:$0xf]
    %v418 = vld [vmem:[%s414 + $0xc] sm:$0xf]
    %v419 = vld [vmem:[%s414 + $0x10] sm:$0xf]
    %v420 = vld [vmem:[%s414 + $0x14] sm:$0xf]
    %v421 = vld [vmem:[%s414 + $0x18] sm:$0xf]
    %v422 = vld [vmem:[%s414 + $0x1c] sm:$0xf]
    %v423 = vld [vmem:[%s414 + $0x20] sm:$0xf]
    %v424 = vld [vmem:[%s414 + $0x24] sm:$0xf]
    %v425 = vld [vmem:[%s414 + $0x28] sm:$0xf]
    %v426 = vld [vmem:[%s414 + $0x2c] sm:$0xf]
    %v427 = vld [vmem:[%s414 + $0x30] sm:$0xf]
    %v428 = vld [vmem:[%s414 + $0x34] sm:$0xf]
    %v429 = vld [vmem:[%s414 + $0x38] sm:$0xf]
    %v430 = vld [vmem:[%s414 + $0x3c] sm:$0xf]
    %s431 = scalar_lea.vmem [#allocation7], 3
    %v432 = vld [vmem:[%s431] sm:$0x1]
    %v434 = vlaneseq
    %v435 = vshrl.u32 %v434, 7
    %v436 = vsub.s32 0, %v435
    %v437 = vrot.slane %v432, %v436
    %v455 = vunpack.c.l.b16 %v415
    %v456 = vunpack.c.l.b16 %v416
    %v457 = vunpack.c.l.b16 %v417
    %v458 = vunpack.c.l.b16 %v418
    %v459 = vunpack.c.l.b16 %v419
    %v460 = vunpack.c.l.b16 %v420
    %v461 = vunpack.c.l.b16 %v421
    %v462 = vunpack.c.l.b16 %v422
    %v463 = vunpack.c.l.b16 %v423
    %v464 = vunpack.c.l.b16 %v424
    %v465 = vunpack.c.l.b16 %v425
    %v466 = vunpack.c.l.b16 %v426
    %v467 = vunpack.c.l.b16 %v427
    %v468 = vunpack.c.l.b16 %v428
    %v469 = vunpack.c.l.b16 %v429
    %v470 = vunpack.c.l.b16 %v430
    %v471 = vpack.c.b16 %v456, %v455
    %v472 = vpack.c.b16 %v458, %v457
    %v473 = vpack.c.b16 %v460, %v459
    %v474 = vpack.c.b16 %v462, %v461
    %v475 = vpack.c.b16 %v464, %v463
    %v476 = vpack.c.b16 %v466, %v465
    %v477 = vpack.c.b16 %v468, %v467
    %v478 = vpack.c.b16 %v470, %v469
    %487 = vmatprep.subr.bf16.mxu0 0
    %488 = vmatpush1.bf16.msra.mxu0 %v478
    %489 = vmatprep.subr.bf16.mxu0 0
    %490 = vmatpush1.bf16.msra.mxu0 %v477
    %491 = vmatprep.subr.bf16.mxu0 0
    %492 = vmatpush1.bf16.msra.mxu0 %v476
    %493 = vmatprep.subr.bf16.mxu0 0
    %494 = vmatpush1.bf16.msra.mxu0 %v475
    %495 = vmatprep.subr.bf16.mxu0 0
    %496 = vmatpush1.bf16.msra.mxu0 %v474
    %497 = vmatprep.subr.bf16.mxu0 0
    %498 = vmatpush1.bf16.msra.mxu0 %v473
    %499 = vmatprep.subr.bf16.mxu0 0
    %500 = vmatpush1.bf16.msra.mxu0 %v472
    %501 = vmatprep.subr.bf16.mxu0 0
    %502 = vmatpush1.bf16.msra.mxu0 %v471
    %503 = vmatprep.subr.bf16.mxu0 0
    %504 = vmatpush2.bf16.msra.mxu0 0
    %505 = vmatprep.subr.bf16.mxu0 0
    %506 = vmatpush2.bf16.msra.mxu0 0
    %507 = vmatprep.subr.bf16.mxu0 0
    %508 = vmatpush2.bf16.msra.mxu0 0
    %509 = vmatprep.subr.bf16.mxu0 0
    %510 = vmatpush2.bf16.msra.mxu0 0
    %511 = vmatprep.subr.bf16.mxu0 0
    %512 = vmatpush2.bf16.msra.mxu0 0
    %513 = vmatprep.subr.bf16.mxu0 0
    %514 = vmatpush2.bf16.msra.mxu0 0
    %515 = vmatprep.subr.bf16.mxu0 0
    %516 = vmatpush2.bf16.msra.mxu0 0
    %517 = vmatprep.subr.bf16.mxu0 0
    %518 = vmatpush2.bf16.msra.mxu0 0
    %519 = vmatprep.mubr.bf16.mxu0 0
    %520 = vmatmul.mubr.bf16.gmra.mxu0 %v413
    %v521 = vpop.f32.mrf.mxu0
    %v522 = vadd.f32 %v437, %v521
    %v523 = vpop.f32.mrf.mxu0
    %v524 = vpop.f32.mrf.mxu0
    %v525 = vadd.f32 %v437, %v524
    %v526 = vpop.f32.mrf.mxu0
    %527 = vdwg.mxu0
    %v528 = vmax.f32 %v522, 0.0
    %v529 = vmax.f32 %v525, 0.0
    %v530 = vpack.c.bf16 %v529, %v528
    %s531 = scalar_lea.vmem [#allocation5], 256
    %v532 = vld [vmem:[%s531] sm:$0xf]
    %v533 = vld [vmem:[%s531 + $0x4] sm:$0xf]
    %v534 = vld [vmem:[%s531 + $0x8] sm:$0xf]
    %v535 = vld [vmem:[%s531 + $0xc] sm:$0xf]
    %v536 = vld [vmem:[%s531 + $0x10] sm:$0xf]
    %v537 = vld [vmem:[%s531 + $0x14] sm:$0xf]
    %v538 = vld [vmem:[%s531 + $0x18] sm:$0xf]
    %v539 = vld [vmem:[%s531 + $0x1c] sm:$0xf]
    %v540 = vld [vmem:[%s531 + $0x20] sm:$0xf]
    %v541 = vld [vmem:[%s531 + $0x24] sm:$0xf]
    %v542 = vld [vmem:[%s531 + $0x28] sm:$0xf]
    %v543 = vld [vmem:[%s531 + $0x2c] sm:$0xf]
    %v544 = vld [vmem:[%s531 + $0x30] sm:$0xf]
    %v545 = vld [vmem:[%s531 + $0x34] sm:$0xf]
    %v546 = vld [vmem:[%s531 + $0x38] sm:$0xf]
    %v547 = vld [vmem:[%s531 + $0x3c] sm:$0xf]
    %s548 = scalar_lea.vmem [#allocation7], 4
    %v549 = vld [vmem:[%s548] sm:$0x1]
    %v551 = vlaneseq
    %v552 = vshrl.u32 %v551, 7
    %v553 = vsub.s32 0, %v552
    %v554 = vrot.slane %v549, %v553
    %v572 = vunpack.c.l.b16 %v532
    %v573 = vunpack.c.l.b16 %v533
    %v574 = vunpack.c.l.b16 %v534
    %v575 = vunpack.c.l.b16 %v535
    %v576 = vunpack.c.l.b16 %v536
    %v577 = vunpack.c.l.b16 %v537
    %v578 = vunpack.c.l.b16 %v538
    %v579 = vunpack.c.l.b16 %v539
    %v580 = vunpack.c.l.b16 %v540
    %v581 = vunpack.c.l.b16 %v541
    %v582 = vunpack.c.l.b16 %v542
    %v583 = vunpack.c.l.b16 %v543
    %v584 = vunpack.c.l.b16 %v544
    %v585 = vunpack.c.l.b16 %v545
    %v586 = vunpack.c.l.b16 %v546
    %v587 = vunpack.c.l.b16 %v547
    %v588 = vpack.c.b16 %v573, %v572
    %v589 = vpack.c.b16 %v575, %v574
    %v590 = vpack.c.b16 %v577, %v576
    %v591 = vpack.c.b16 %v579, %v578
    %v592 = vpack.c.b16 %v581, %v580
    %v593 = vpack.c.b16 %v583, %v582
    %v594 = vpack.c.b16 %v585, %v584
    %v595 = vpack.c.b16 %v587, %v586
    %604 = vmatprep.subr.bf16.mxu0 0
    %605 = vmatpush1.bf16.msra.mxu0 %v595
    %606 = vmatprep.subr.bf16.mxu0 0
    %607 = vmatpush1.bf16.msra.mxu0 %v594
    %608 = vmatprep.subr.bf16.mxu0 0
    %609 = vmatpush1.bf16.msra.mxu0 %v593
    %610 = vmatprep.subr.bf16.mxu0 0
    %611 = vmatpush1.bf16.msra.mxu0 %v592
    %612 = vmatprep.subr.bf16.mxu0 0
    %613 = vmatpush1.bf16.msra.mxu0 %v591
    %614 = vmatprep.subr.bf16.mxu0 0
    %615 = vmatpush1.bf16.msra.mxu0 %v590
    %616 = vmatprep.subr.bf16.mxu0 0
    %617 = vmatpush1.bf16.msra.mxu0 %v589
    %618 = vmatprep.subr.bf16.mxu0 0
    %619 = vmatpush1.bf16.msra.mxu0 %v588
    %620 = vmatprep.subr.bf16.mxu0 0
    %621 = vmatpush2.bf16.msra.mxu0 0
    %622 = vmatprep.subr.bf16.mxu0 0
    %623 = vmatpush2.bf16.msra.mxu0 0
    %624 = vmatprep.subr.bf16.mxu0 0
    %625 = vmatpush2.bf16.msra.mxu0 0
    %626 = vmatprep.subr.bf16.mxu0 0
    %627 = vmatpush2.bf16.msra.mxu0 0
    %628 = vmatprep.subr.bf16.mxu0 0
    %629 = vmatpush2.bf16.msra.mxu0 0
    %630 = vmatprep.subr.bf16.mxu0 0
    %631 = vmatpush2.bf16.msra.mxu0 0
    %632 = vmatprep.subr.bf16.mxu0 0
    %633 = vmatpush2.bf16.msra.mxu0 0
    %634 = vmatprep.subr.bf16.mxu0 0
    %635 = vmatpush2.bf16.msra.mxu0 0
    %636 = vmatprep.mubr.bf16.mxu0 0
    %637 = vmatmul.mubr.bf16.gmra.mxu0 %v530
    %v638 = vpop.f32.mrf.mxu0
    %v639 = vadd.f32 %v554, %v638
    %v640 = vpop.f32.mrf.mxu0
    %v641 = vpop.f32.mrf.mxu0
    %v642 = vadd.f32 %v554, %v641
    %v643 = vpop.f32.mrf.mxu0
    %644 = vdwg.mxu0
    %v645 = vpack.c.bf16 %v642, %v639
    %v647 = vunpack.c.l.b16 %v645
    %v648 = vunpack.c.h.b16 %v645
    %v649 = vpack.c.b16 %v647, %v647
    %v650 = vpack.c.b16 %v648, %v648
    %653 = vst [vmem:[#allocation8] sm:$0xf] %v649
    %654 = vst [vmem:[#allocation8 + $0x4] sm:$0xf] %v650
    // Predicated region
    $region26: #{tpu_custom_call.1} parent=1 // pred_check
      _
    $region27: #{tpu_custom_call.1} parent=1 // pred_check_branch
      %656 = sbr.rel (0) target = $region29
    $region28: #{tpu_custom_call.1} parent=1 // pred_region
      %s658 = ssub.s32 128, 128
      %659 = vsyncadd [#allocation4], %s658
      %s660 = sshll.u32 [#allocation8], 4
      %s661 = int_to_ptr.vmem [resolvable:$true] %s660
      %666 = dma.vmem_to_hbm [thread:$0]  %s661, 128, %s3, [#allocation4], 64, 64, 4
    $region29: #{tpu_custom_call.1} parent=1 // pred_fallthru
      _
    // Predicated region
    $region30: #{tpu_custom_call.1} parent=1 // pred_check
      _
    $region31: #{tpu_custom_call.1} parent=1 // pred_check_branch
      %668 = sbr.rel (0) target = $region33
    $region32: #{tpu_custom_call.1} parent=1 // pred_region
      %669 = dma.done [#allocation4], 128
    $region33: #{tpu_custom_call.1} parent=1 // pred_fallthru
      _
    %670 = vsyncpa [#allocation3], 1
    %671 = vsyncpa [#allocation6], 1
    %672 = vsyncpa [#allocation4], 1

</llo_original>
